<compile_context>
chip_gen: v5e
topology: v5e:2x2
jax: 0.10.0
libtpu: 0.0.40
codegen_flags: <defaults>
</compile_context>

<pallas_src>
import jax
import jax.numpy as jnp
from jax.experimental import pallas as pl
from jax.experimental.pallas import tpu as pltpu  # noqa: F401  (TPU backend assumed)


def _round_up(x, m):
    return -(-x // m) * m


# ---------------------------------------------------------------------------
# Fused kernel: fc + L2-normalize (q, k)  ->  l_pos (all pairs)  +  l_neg
# ---------------------------------------------------------------------------
def _moco_fused_kernel(xq_ref, xk_ref, wq_ref, bq_ref, wk_ref, bk_ref,
                       queue_ref, k_ref, logits_ref):
    # xq_ref, xk_ref : [N*P, Cin]   pooled query / (unshuffled) key features
    # wq_ref, wk_ref : [Cin, D]     fc weights of query / key encoders
    # bq_ref, bk_ref : [1, D]       fc biases
    # queue_ref      : [D, P*K]     negatives queue, feature-major layout
    # k_ref          : [N*P, D]     OUT: normalized key features (for enqueue)
    # logits_ref     : [N*P, LP+P*K] OUT: [ l_pos(all pairs) | 0 pad | l_neg ]

    def encode(x, w, b):
        f = jnp.dot(x, w, preferred_element_type=jnp.float32) + b
        ss = jnp.sum(f * f, axis=-1, keepdims=True)
        # F.normalize(eps=1e-12):  f / max(||f||, eps) == f * rsqrt(max(ss, eps^2))
        return f * jax.lax.rsqrt(jnp.maximum(ss, 1e-24))

    q = encode(xq_ref[...], wq_ref[...], bq_ref[...])          # [NP, D]
    k = encode(xk_ref[...], wk_ref[...], bk_ref[...])          # [NP, D]
    k_ref[...] = k

    np_rows = q.shape[0]
    lpos_pad = logits_ref.shape[1] - queue_ref.shape[1]

    # positive logits, all pairs: q @ k^T   (block diagonal extracted in wrapper)
    l_pos = jax.lax.dot_general(
        q, k, (((1,), (1,)), ((), ())), preferred_element_type=jnp.float32)
    # negative logits against the whole resident queue tile
    l_neg = jnp.dot(q, queue_ref[...], preferred_element_type=jnp.float32)

    pieces = [l_pos]
    if lpos_pad > np_rows:
        pieces.append(jnp.zeros((np_rows, lpos_pad - np_rows), jnp.float32))
    pieces.append(l_neg)
    # single lane-dense store (width is a multiple of 128; l_neg lands 128-aligned)
    logits_ref[...] = jnp.concatenate(pieces, axis=-1)


def moco_forward_core(pooled_q, pooled_k, w_q, b_q, w_k, b_k, queue2d):
    """pooled_*: [N, P, Cin]; queue2d: [D, P*K].
    Returns (k [N,P,D], l_pos [N,P,P], l_neg [N,P,P,K])."""
    N, P, Cin = pooled_q.shape
    D = w_q.shape[1]
    PK = queue2d.shape[1]
    K = PK // P
    NP = N * P
    lpos_pad = _round_up(NP, 128)

    k_flat, logits = pl.pallas_call(
        _moco_fused_kernel,
        out_shape=(
            jax.ShapeDtypeStruct((NP, D), jnp.float32),
            jax.ShapeDtypeStruct((NP, lpos_pad + PK), jnp.float32),
        ),
    )(pooled_q.reshape(NP, Cin), pooled_k.reshape(NP, Cin),
      w_q, b_q.reshape(1, D), w_k, b_k.reshape(1, D), queue2d)

    k = k_flat.reshape(N, P, D)
    # block diagonal of the all-pairs slab:  l_pos[n, i, j] = q[n, i] . k[n, j]
    lpos_all = logits[:, :NP].reshape(N, P, N, P)
    l_pos = lpos_all[jnp.arange(N), :, jnp.arange(N), :]           # [N, P, P]
    l_neg = logits[:, lpos_pad:].reshape(N, P, P, K)               # [N, P, P, K]
    return k, l_pos, l_neg


# ---------------------------------------------------------------------------
# MoCo module (synthetic base_encoder: adaptive avg-pool + per-position fc)
# ---------------------------------------------------------------------------
class MoCoPallas:
    def __init__(self, key, c_in=4, dim=32, K=64, m=0.999, T=0.07,
                 avg_pool_shape=(2, 2)):
        self.K, self.m, self.T = K, m, T
        self.avg_pool_shape = avg_pool_shape
        P = avg_pool_shape[0] * avg_pool_shape[1]
        k1, k2, k3 = jax.random.split(key, 3)

        # query encoder fc params (synthetic base_encoder head: Cin -> dim)
        self.w_q = 0.1 * jax.random.normal(k1, (c_in, dim), jnp.float32)
        self.b_q = jnp.zeros((dim,), jnp.float32)
        # key encoder copies query encoder params (requires_grad=False)
        self.w_k = self.w_q
        self.b_k = self.b_q

        # queue buffer: randn(P, dim, K) normalized along dim=0 (exactly as the
        # module does; note this is the position axis, not the feature axis).
        queue_pdk = jax.random.normal(k2, (P, dim, K), jnp.float32)
        queue_pdk = queue_pdk / jnp.maximum(
            jnp.linalg.norm(queue_pdk, axis=0, keepdims=True), 1e-12)
        # persist in kernel-friendly feature-major layout [D, P, K]
        self.queue_dpk = jnp.transpose(queue_pdk, (1, 0, 2))
        self.queue_ptr = 0
        self._rng = k3

    # synthetic base_encoder front: adaptive avg-pool NCHW -> (ph, pw) positions
    def _pool(self, im):
        N, C, H, W = im.shape
        ph, pw = self.avg_pool_shape
        pooled = im.reshape(N, C, ph, H // ph, pw, W // pw).mean(axis=(3, 5))
        return pooled.reshape(N, C, ph * pw).transpose(0, 2, 1)    # [N, P, Cin]

    def queue_original_layout(self):
        """Queue as registered in the module: [P, D, K]."""
        return jnp.transpose(self.queue_dpk, (1, 0, 2))

    def forward(self, im_q, im_k):
        N = im_q.shape[0]
        assert self.K % N == 0, "original MoCo requires K % batch_size == 0"

        # momentum update of key encoder (no grad)
        self.w_k = self.w_k * self.m + self.w_q * (1.0 - self.m)
        self.b_k = self.b_k * self.m + self.b_q * (1.0 - self.m)

        # batch shuffle / unshuffle (single device: world_size == 1). The
        # encoder here is per-sample (pool + fc), so applying the permutation
        # to the pooled features before the kernel preserves the semantics.
        self._rng, sk = jax.random.split(self._rng)
        idx_shuffle = jax.random.permutation(sk, N)
        idx_unshuffle = jnp.argsort(idx_shuffle)

        pooled_q = self._pool(im_q)
        pooled_k = self._pool(im_k[idx_shuffle])[idx_unshuffle]

        D = self.w_q.shape[1]
        k, l_pos, l_neg = moco_forward_core(
            pooled_q, pooled_k, self.w_q, self.b_q, self.w_k, self.b_k,
            self.queue_dpk.reshape(D, -1))                         # free reshape

        # TODO(synk): PyTorch labels are torch.long (int64); JAX uses int32 here.
        labels = jnp.zeros((N,), jnp.int32)

        # dequeue and enqueue:  queue[:, :, ptr:ptr+N] = k.permute(1, 2, 0)
        # in the persistent [D, P, K] layout this is keys = k^T of shape [D, P, N]
        keys = jnp.transpose(k, (2, 1, 0))                         # [D, P, N]
        self.queue_dpk = jax.lax.dynamic_update_slice(
            self.queue_dpk, keys, (0, 0, self.queue_ptr))
        self.queue_ptr = (self.queue_ptr + N) % self.K

        return l_pos, l_neg, labels


# ---------------------------------------------------------------------------
# Reference (plain JAX) for a correctness check
# ---------------------------------------------------------------------------
def _ref_encode(im, w, b, avg_pool_shape):
    N, C, H, W = im.shape
    ph, pw = avg_pool_shape
    pooled = im.reshape(N, C, ph, H // ph, pw, W // pw).mean(axis=(3, 5))
    pooled = pooled.reshape(N, C, ph * pw).transpose(0, 2, 1)
    f = pooled @ w + b
    return f / jnp.maximum(jnp.linalg.norm(f, axis=-1, keepdims=True), 1e-12)


if __name__ == "__main__":
    key = jax.random.PRNGKey(0)
    k_model, k_imq, k_imk = jax.random.split(key, 3)

    N, C_in, H, W = 2, 4, 16, 16
    DIM, K = 32, 64

    model = MoCoPallas(k_model, c_in=C_in, dim=DIM, K=K, avg_pool_shape=(2, 2))
    im_q = jax.random.normal(k_imq, (N, C_in, H, W), jnp.float32)
    im_k = jax.random.normal(k_imk, (N, C_in, H, W), jnp.float32)

    queue0 = model.queue_original_layout()   # snapshot before enqueue side-effect
    w_q, b_q = model.w_q, model.b_q

    l_pos, l_neg, labels = model.forward(im_q, im_k)
    jax.block_until_ready((l_pos, l_neg, labels))

    # reference (key encoder params == query encoder params at init, so the
    # momentum update leaves them identical on the first step)
    q_ref = _ref_encode(im_q, w_q, b_q, model.avg_pool_shape)
    k_ref = _ref_encode(im_k, w_q, b_q, model.avg_pool_shape)
    l_pos_ref = jnp.einsum('ncd,nkd->nck', q_ref, k_ref)
    l_neg_ref = jnp.einsum('ncp,dpk->ncdk', q_ref, queue0)

    P = model.avg_pool_shape[0] * model.avg_pool_shape[1]
    assert l_pos.shape == (N, P, P) and l_neg.shape == (N, P, P, K)
    assert jnp.allclose(l_pos, l_pos_ref, atol=1e-4, rtol=1e-4)
    assert jnp.allclose(l_neg, l_neg_ref, atol=1e-4, rtol=1e-4)
    assert labels.shape == (N,) and int(labels.sum()) == 0

    # queue enqueue check (kernel k written into the persistent queue layout)
    queue1 = model.queue_original_layout()
    assert jnp.allclose(queue1[:, :, :N], jnp.transpose(k_ref, (1, 2, 0)),
                        atol=1e-4, rtol=1e-4)

    print("KERNEL_OK")
</pallas_src>

<mosaic_0001>
module attributes {stable_mosaic.version = 11 : i64} {
  func.func @_moco_fused_kernel(%arg0: memref<8x4xf32, #tpu.memory_space<vmem>>, %arg1: memref<8x4xf32, #tpu.memory_space<vmem>>, %arg2: memref<4x32xf32, #tpu.memory_space<vmem>>, %arg3: memref<1x32xf32, #tpu.memory_space<vmem>>, %arg4: memref<4x32xf32, #tpu.memory_space<vmem>>, %arg5: memref<1x32xf32, #tpu.memory_space<vmem>>, %arg6: memref<32x256xf32, #tpu.memory_space<vmem>>, %arg7: memref<8x32xf32, #tpu.memory_space<vmem>>, %arg8: memref<8x384xf32, #tpu.memory_space<vmem>>) attributes {dimension_semantics = [], scalar_prefetch = 0 : i64, scratch_operands = 0 : i64, tpu.core_type = #tpu.core_type<tc>} {
    %c0 = arith.constant 0 : index
    %c0_0 = arith.constant 0 : index
    %0 = vector.load %arg0[%c0, %c0_0] : memref<8x4xf32, #tpu.memory_space<vmem>>, vector<8x4xf32>
    %c0_1 = arith.constant 0 : index
    %c0_2 = arith.constant 0 : index
    %1 = vector.load %arg2[%c0_1, %c0_2] : memref<4x32xf32, #tpu.memory_space<vmem>>, vector<4x32xf32>
    %c0_3 = arith.constant 0 : index
    %c0_4 = arith.constant 0 : index
    %2 = vector.load %arg3[%c0_3, %c0_4] : memref<1x32xf32, #tpu.memory_space<vmem>>, vector<1x32xf32>
    %cst = arith.constant dense<0.000000e+00> : vector<8x32xf32>
    %3 = tpu.matmul %0, %1, %cst {dimension_numbers = #tpu.dot_dimension_numbers<[1], [0], [0], [1], [0, 0, 1, 1], [], []>} : vector<8x4xf32>, vector<4x32xf32>, vector<8x32xf32> -> vector<8x32xf32>
    %4 = vector.broadcast %2 : vector<1x32xf32> to vector<8x32xf32>
    %5 = arith.addf %3, %4 : vector<8x32xf32>
    %6 = arith.mulf %5, %5 : vector<8x32xf32>
    %cst_5 = arith.constant dense<0.000000e+00> : vector<8xf32>
    %7 = vector.multi_reduction <add>, %6, %cst_5 [1] : vector<8x32xf32> to vector<8xf32>
    %8 = vector.shape_cast %7 : vector<8xf32> to vector<8x1xf32>
    %cst_6 = arith.constant 1.000000e-24 : f32
    %9 = vector.broadcast %cst_6 : f32 to vector<8x1xf32>
    %10 = arith.maximumf %8, %9 : vector<8x1xf32>
    %11 = math.rsqrt %10 : vector<8x1xf32>
    %12 = vector.broadcast %11 : vector<8x1xf32> to vector<8x32xf32>
    %13 = arith.mulf %5, %12 : vector<8x32xf32>
    %c0_7 = arith.constant 0 : index
    %c0_8 = arith.constant 0 : index
    %14 = vector.load %arg1[%c0_7, %c0_8] : memref<8x4xf32, #tpu.memory_space<vmem>>, vector<8x4xf32>
    %c0_9 = arith.constant 0 : index
    %c0_10 = arith.constant 0 : index
    %15 = vector.load %arg4[%c0_9, %c0_10] : memref<4x32xf32, #tpu.memory_space<vmem>>, vector<4x32xf32>
    %c0_11 = arith.constant 0 : index
    %c0_12 = arith.constant 0 : index
    %16 = vector.load %arg5[%c0_11, %c0_12] : memref<1x32xf32, #tpu.memory_space<vmem>>, vector<1x32xf32>
    %cst_13 = arith.constant dense<0.000000e+00> : vector<8x32xf32>
    %17 = tpu.matmul %14, %15, %cst_13 {dimension_numbers = #tpu.dot_dimension_numbers<[1], [0], [0], [1], [0, 0, 1, 1], [], []>} : vector<8x4xf32>, vector<4x32xf32>, vector<8x32xf32> -> vector<8x32xf32>
    %18 = vector.broadcast %16 : vector<1x32xf32> to vector<8x32xf32>
    %19 = arith.addf %17, %18 : vector<8x32xf32>
    %20 = arith.mulf %19, %19 : vector<8x32xf32>
    %cst_14 = arith.constant dense<0.000000e+00> : vector<8xf32>
    %21 = vector.multi_reduction <add>, %20, %cst_14 [1] : vector<8x32xf32> to vector<8xf32>
    %22 = vector.shape_cast %21 : vector<8xf32> to vector<8x1xf32>
    %cst_15 = arith.constant 1.000000e-24 : f32
    %23 = vector.broadcast %cst_15 : f32 to vector<8x1xf32>
    %24 = arith.maximumf %22, %23 : vector<8x1xf32>
    %25 = math.rsqrt %24 : vector<8x1xf32>
    %26 = vector.broadcast %25 : vector<8x1xf32> to vector<8x32xf32>
    %27 = arith.mulf %19, %26 : vector<8x32xf32>
    %c0_16 = arith.constant 0 : index
    %c0_17 = arith.constant 0 : index
    %28 = vector.load %arg7[%c0_16, %c0_17] : memref<8x32xf32, #tpu.memory_space<vmem>>, vector<8x32xf32>
    tpu.vector_store %arg7[%c0_16, %c0_17], %27 {strides = array<i32>} : memref<8x32xf32, #tpu.memory_space<vmem>>, vector<8x32xf32>,
    %cst_18 = arith.constant dense<0.000000e+00> : vector<8x8xf32>
    %29 = tpu.matmul %13, %27, %cst_18 {dimension_numbers = #tpu.dot_dimension_numbers<[1], [1], [0], [0], [0, 0, 1, 0], [], []>} : vector<8x32xf32>, vector<8x32xf32>, vector<8x8xf32> -> vector<8x8xf32>
    %c0_19 = arith.constant 0 : index
    %c0_20 = arith.constant 0 : index
    %30 = vector.load %arg6[%c0_19, %c0_20] : memref<32x256xf32, #tpu.memory_space<vmem>>, vector<32x256xf32>
    %cst_21 = arith.constant dense<0.000000e+00> : vector<8x256xf32>
    %31 = tpu.matmul %13, %30, %cst_21 {dimension_numbers = #tpu.dot_dimension_numbers<[1], [0], [0], [1], [0, 0, 1, 1], [], []>} : vector<8x32xf32>, vector<32x256xf32>, vector<8x256xf32> -> vector<8x256xf32>
    %cst_22 = arith.constant 0.000000e+00 : f32
    %32 = vector.broadcast %cst_22 : f32 to vector<8x120xf32>
    %33 = tpu.concatenate %29, %32, %31 in 1 : vector<8x8xf32>, vector<8x120xf32>, vector<8x256xf32> -> vector<8x384xf32>
    %c0_23 = arith.constant 0 : index
    %c0_24 = arith.constant 0 : index
    %34 = vector.load %arg8[%c0_23, %c0_24] : memref<8x384xf32, #tpu.memory_space<vmem>>, vector<8x384xf32>
    tpu.vector_store %arg8[%c0_23, %c0_24], %33 {strides = array<i32>} : memref<8x384xf32, #tpu.memory_space<vmem>>, vector<8x384xf32>,
    return
  }
}

</mosaic_0001>

<llo_original>
// kernel: tpu_custom_call.1
$region0: #{tpu_custom_call.1}
  #allocation0 [shape = 'u32[]', space=smem, size = 0x4, offset = 0x4, fixed_abs, tag = 'smem constant byte address 0x4 - core index']
  #allocation1 [shape = 'u32[72,128]{1,0:T(1,128)}', space=vmem, size = 0x9000, scoped, tag = 'internal scratch']
  %s0 = inlined_call_operand.vmem [shape: f32[8,4], index: 0, kind: input, shape index: {}]
  %s1 = inlined_call_operand.vmem [shape: f32[8,4], index: 1, kind: input, shape index: {}]
  %s2 = inlined_call_operand.vmem [shape: f32[4,32], index: 2, kind: input, shape index: {}]
  %s3 = inlined_call_operand.vmem [shape: f32[1,32], index: 3, kind: input, shape index: {}]
  %s4 = inlined_call_operand.vmem [shape: f32[4,32], index: 4, kind: input, shape index: {}]
  %s5 = inlined_call_operand.vmem [shape: f32[1,32], index: 5, kind: input, shape index: {}]
  %s6 = inlined_call_operand.hbm [shape: f32[32,256], index: 6, kind: input, shape index: {}]
  %s7 = inlined_call_operand.hbm [shape: f32[8,32], index: 7, kind: output, shape index: {0}]
  %s8 = inlined_call_operand.hbm [shape: f32[8,384], index: 8, kind: output, shape index: {1}]
  %9 = xla_tuple %s7, %s8
  %s10 = sld [smem:[#allocation0]]
  $region50: #{tpu_custom_call.1} parent=0
    _
  %s12 = ssub.s32 1, %s10
  %s13 = scalar_select 0, %s12, %s10
  $region1: #{tpu_custom_call.1} parent=0
    #allocation2 [shape = 'u8[32768]{0}', space=vmem, size = 0x8000, scoped, tag = 'input window, operand 6, single buffered']
    #allocation3 [shape = 's32[1]{0}', space=sflag, size = 0x4, scoped, tag = 'scoped memory for tpu_custom_call.1']
    #allocation4 [shape = 's32[1]{0}', space=sflag, size = 0x4, scoped, tag = 'scoped memory for tpu_custom_call.1']
    #allocation5 [shape = 'u8[4096]{0}', space=vmem, size = 0x1000, scoped, tag = 'output window, operand 0, single buffered']
    #allocation6 [shape = 'u8[12288]{0}', space=vmem, size = 0x3000, scoped, tag = 'output window, operand 1, single buffered']
    #allocation7 [shape = 's32[1]{0}', space=sflag, size = 0x4, scoped, tag = 'scoped memory for tpu_custom_call.1']
    %14 = vsyncpa [#allocation3], 0
    %15 = vsyncpa [#allocation4], 0
    %16 = vsyncpa [#allocation7], 0
    // Predicated region
    $region2: #{tpu_custom_call.1} parent=1 // pred_check
      _
    $region3: #{tpu_custom_call.1} parent=1 // pred_check_branch
      %18 = sbr.rel (0) target = $region5
    $region4: #{tpu_custom_call.1} parent=1 // pred_region
      _
    $region5: #{tpu_custom_call.1} parent=1 // pred_fallthru
      _
    // Predicated region
    $region6: #{tpu_custom_call.1} parent=1 // pred_check
      _
    $region7: #{tpu_custom_call.1} parent=1 // pred_check_branch
      %20 = sbr.rel (0) target = $region9
    $region8: #{tpu_custom_call.1} parent=1 // pred_region
      _
    $region9: #{tpu_custom_call.1} parent=1 // pred_fallthru
      _
    // Predicated region
    $region10: #{tpu_custom_call.1} parent=1 // pred_check
      _
    $region11: #{tpu_custom_call.1} parent=1 // pred_check_branch
      %22 = sbr.rel (0) target = $region13
    $region12: #{tpu_custom_call.1} parent=1 // pred_region
      _
    $region13: #{tpu_custom_call.1} parent=1 // pred_fallthru
      _
    // Predicated region
    $region14: #{tpu_custom_call.1} parent=1 // pred_check
      _
    $region15: #{tpu_custom_call.1} parent=1 // pred_check_branch
      %24 = sbr.rel (0) target = $region17
    $region16: #{tpu_custom_call.1} parent=1 // pred_region
      _
    $region17: #{tpu_custom_call.1} parent=1 // pred_fallthru
      _
    // Predicated region
    $region18: #{tpu_custom_call.1} parent=1 // pred_check
      _
    $region19: #{tpu_custom_call.1} parent=1 // pred_check_branch
      %26 = sbr.rel (0) target = $region21
    $region20: #{tpu_custom_call.1} parent=1 // pred_region
      _
    $region21: #{tpu_custom_call.1} parent=1 // pred_fallthru
      _
    // Predicated region
    $region22: #{tpu_custom_call.1} parent=1 // pred_check
      _
    $region23: #{tpu_custom_call.1} parent=1 // pred_check_branch
      %28 = sbr.rel (0) target = $region25
    $region24: #{tpu_custom_call.1} parent=1 // pred_region
      _
    $region25: #{tpu_custom_call.1} parent=1 // pred_fallthru
      _
    // Predicated region
    $region26: #{tpu_custom_call.1} parent=1 // pred_check
      _
    $region27: #{tpu_custom_call.1} parent=1 // pred_check_branch
      %30 = sbr.rel (0) target = $region29
    $region28: #{tpu_custom_call.1} parent=1 // pred_region
      %32 = vsyncadd [#allocation3], 0
      %s33 = sshll.u32 %s6, 4
      %s34 = int_to_ptr.hbm [resolvable:$true] %s33
      %s35 = sshll.u32 [#allocation2], 4
      %s36 = int_to_ptr.vmem [resolvable:$true] %s35
      %41 = dma.hbm_to_vmem [thread:$0]  %s34, 1024, %s36, [#allocation3], 256, 256, 16
    $region29: #{tpu_custom_call.1} parent=1 // pred_fallthru
      _
    // Predicated region
    $region30: #{tpu_custom_call.1} parent=1 // pred_check
      _
    $region31: #{tpu_custom_call.1} parent=1 // pred_check_branch
      %43 = sbr.rel (0) target = $region33
    $region32: #{tpu_custom_call.1} parent=1 // pred_region
      %45 = dma.done [#allocation3], 1024
    $region33: #{tpu_custom_call.1} parent=1 // pred_fallthru
      _
    %v46 = vld [vmem:[%s0] sm:$0xff]
    %v47 = vld [vmem:[%s2] sm:$0xf]
    %v48 = vld [vmem:[%s3] sm:$0x1]
    %v50 = vperm.slane %v48, 0
    %vm52 = vcmask 31744
    %v54 = vsel %vm52, %v46, 0
    %vm56 = vcmask 1043456
    %v58 = vsel %vm56, %v47, 0
    %60 = vmatpush.msra.mxu0 0.0
    %61 = vmatpush.msra.mxu0 0.0
    %62 = vmatpush.msra.mxu0 0.0
    %63 = vmatpush.msra.mxu0 0.0
    %64 = vmatpush.msra.mxu0 0.0
    %65 = vmatpush.msra.mxu0 0.0
    %66 = vmatpush.msra.mxu0 0.0
    %67 = vmatpush.msra.mxu0 0.0
    %68 = vmatpush.msra.mxu0 0.0
    %69 = vmatpush.msra.mxu0 0.0
    %70 = vmatpush.msra.mxu0 0.0
    %71 = vmatpush.msra.mxu0 0.0
    %72 = vmatpush.msra.mxu0 0.0
    %73 = vmatpush.msra.mxu0 0.0
    %74 = vmatpush.msra.mxu0 0.0
    %75 = vmatpush.msra.mxu0 %v58
    %76 = vmatmul.f32.gmra.mxu0 %v54
    %v77 = vpop.f32.mrf.mxu0
    %v78 = vadd.f32 %v50, %v77
    %79 = vdwg.mxu0
    %v80 = vmul.f32 %v78, %v78
    %vm81 = vcmask 261120
    %v82 = vsel %vm81, %v80, 0.0
    %83 = vadd.xlane.f32.xlu0 %v82
    %v84 = vpop.xlane.xlu0 %83
    %v85 = vmax.f32 %v84, 1e-24
    %v86 = vrsqrt.pop %v85
    %v87 = vmul.f32 %v86, %v85
    %v88 = vmul.f32 %v87, %v86
    %v89 = vmul.f32 0.5, %v88
    %v90 = vsub.f32 1.5, %v89
    %v91 = vmul.f32 %v86, %v90
    %vm92 = vweird.f32 %v85
    %vm93 = vweird.f32 %v86
    %vm94 = vmor %vm92, %vm93
    %v95 = vsel %vm94, %v86, %v91
    %v96 = vmul.f32 %v78, %v95
    %v97 = vld [vmem:[%s1] sm:$0xff]
    %v98 = vld [vmem:[%s4] sm:$0xf]
    %v99 = vld [vmem:[%s5] sm:$0x1]
    %v101 = vperm.slane %v99, 0
    %v104 = vsel %vm52, %v97, 0
    %v107 = vsel %vm56, %v98, 0
    %109 = vmatpush.msra.mxu0 0.0
    %110 = vmatpush.msra.mxu0 0.0
    %111 = vmatpush.msra.mxu0 0.0
    %112 = vmatpush.msra.mxu0 0.0
    %113 = vmatpush.msra.mxu0 0.0
    %114 = vmatpush.msra.mxu0 0.0
    %115 = vmatpush.msra.mxu0 0.0
    %116 = vmatpush.msra.mxu0 0.0
    %117 = vmatpush.msra.mxu0 0.0
    %118 = vmatpush.msra.mxu0 0.0
    %119 = vmatpush.msra.mxu0 0.0
    %120 = vmatpush.msra.mxu0 0.0
    %121 = vmatpush.msra.mxu0 0.0
    %122 = vmatpush.msra.mxu0 0.0
    %123 = vmatpush.msra.mxu0 0.0
    %124 = vmatpush.msra.mxu0 %v107
    %125 = vmatmul.f32.gmra.mxu0 %v104
    %v126 = vpop.f32.mrf.mxu0
    %v127 = vadd.f32 %v101, %v126
    %128 = vdwg.mxu0
    %v129 = vmul.f32 %v127, %v127
    %v130 = vsel %vm81, %v129, 0.0
    %131 = vadd.xlane.f32.xlu0 %v130
    %v132 = vpop.xlane.xlu0 %131
    %v133 = vmax.f32 %v132, 1e-24
    %v134 = vrsqrt.pop %v133
    %v135 = vmul.f32 %v134, %v133
    %v136 = vmul.f32 %v135, %v134
    %v137 = vmul.f32 0.5, %v136
    %v138 = vsub.f32 1.5, %v137
    %v139 = vmul.f32 %v134, %v138
    %vm140 = vweird.f32 %v133
    %vm141 = vweird.f32 %v134
    %vm142 = vmor %vm140, %vm141
    %v143 = vsel %vm142, %v134, %v139
    %v144 = vmul.f32 %v127, %v143
    %145 = vst.msk [vmem:[#allocation5] sm:$0xff] %vm81, %v144
    %v147 = vsel %vm81, %v96, 0
    %v150 = vsel %vm81, %v144, 0
    %152 = vmatpush.xpose.msra.mxu0 0.0
    %153 = vmatpush.xpose.msra.mxu0 0.0
    %154 = vmatpush.xpose.msra.mxu0 0.0
    %155 = vmatpush.xpose.msra.mxu0 0.0
    %156 = vmatpush.xpose.msra.mxu0 0.0
    %157 = vmatpush.xpose.msra.mxu0 0.0
    %158 = vmatpush.xpose.msra.mxu0 0.0
    %159 = vmatpush.xpose.msra.mxu0 0.0
    %160 = vmatpush.xpose.msra.mxu0 0.0
    %161 = vmatpush.xpose.msra.mxu0 0.0
    %162 = vmatpush.xpose.msra.mxu0 0.0
    %163 = vmatpush.xpose.msra.mxu0 0.0
    %164 = vmatpush.xpose.msra.mxu0 0.0
    %165 = vmatpush.xpose.msra.mxu0 0.0
    %166 = vmatpush.xpose.msra.mxu0 0.0
    %167 = vmatpush.xpose.msra.mxu0 %v150
    %168 = vmatmul.f32.gmra.mxu0 %v147
    %v169 = vpop.f32.mrf.mxu0
    %v170 = vadd.f32 0.0, %v169
    %171 = vdwg.mxu0
    %v172 = vld [vmem:[#allocation2] sm:$0xff]
    %v173 = vld [vmem:[#allocation2 + $0x8] sm:$0xff]
    %v174 = vld [vmem:[#allocation2 + $0x10] sm:$0xff]
    %v175 = vld [vmem:[#allocation2 + $0x18] sm:$0xff]
    %v176 = vld [vmem:[#allocation2 + $0x20] sm:$0xff]
    %v177 = vld [vmem:[#allocation2 + $0x28] sm:$0xff]
    %v178 = vld [vmem:[#allocation2 + $0x30] sm:$0xff]
    %v179 = vld [vmem:[#allocation2 + $0x38] sm:$0xff]
    %180 = vmatpush.msra.mxu0 0.0
    %181 = vmatpush.msra.mxu0 0.0
    %182 = vmatpush.msra.mxu0 0.0
    %183 = vmatpush.msra.mxu0 0.0
    %184 = vmatpush.msra.mxu0 0.0
    %185 = vmatpush.msra.mxu0 0.0
    %186 = vmatpush.msra.mxu0 0.0
    %187 = vmatpush.msra.mxu0 0.0
    %188 = vmatpush.msra.mxu0 0.0
    %189 = vmatpush.msra.mxu0 0.0
    %190 = vmatpush.msra.mxu0 0.0
    %191 = vmatpush.msra.mxu0 0.0
    %192 = vmatpush.msra.mxu0 %v178
    %193 = vmatpush.msra.mxu0 %v176
    %194 = vmatpush.msra.mxu0 %v174
    %195 = vmatpush.msra.mxu0 %v172
    %196 = vmatmul.f32.gmra.mxu0 %v147
    %v197 = vpop.f32.mrf.mxu0
    %v198 = vadd.f32 0.0, %v197
    %199 = vdwg.mxu0
    %200 = vmatpush.msra.mxu0 0.0
    %201 = vmatpush.msra.mxu0 0.0
    %202 = vmatpush.msra.mxu0 0.0
    %203 = vmatpush.msra.mxu0 0.0
    %204 = vmatpush.msra.mxu0 0.0
    %205 = vmatpush.msra.mxu0 0.0
    %206 = vmatpush.msra.mxu0 0.0
    %207 = vmatpush.msra.mxu0 0.0
    %208 = vmatpush.msra.mxu0 0.0
    %209 = vmatpush.msra.mxu0 0.0
    %210 = vmatpush.msra.mxu0 0.0
    %211 = vmatpush.msra.mxu0 0.0
    %212 = vmatpush.msra.mxu0 %v179
    %213 = vmatpush.msra.mxu0 %v177
    %214 = vmatpush.msra.mxu0 %v175
    %215 = vmatpush.msra.mxu0 %v173
    %216 = vmatmul.f32.gmra.mxu0 %v147
    %v217 = vpop.f32.mrf.mxu0
    %v218 = vadd.f32 0.0, %v217
    %219 = vdwg.mxu0
    %vm220 = vcmask 64512
    %v221 = vsel %vm220, %v170, 0.0
    %222 = vst [vmem:[#allocation6] sm:$0xff] %v221
    %223 = vst [vmem:[#allocation6 + $0x8] sm:$0xff] %v198
    %224 = vst [vmem:[#allocation6 + $0x10] sm:$0xff] %v218
    // Predicated region
    $region34: #{tpu_custom_call.1} parent=1 // pred_check
      _
    $region35: #{tpu_custom_call.1} parent=1 // pred_check_branch
      %226 = sbr.rel (0) target = $region37
    $region36: #{tpu_custom_call.1} parent=1 // pred_region
      %228 = vsyncadd [#allocation4], 0
      %s230 = sshll.u32 [#allocation5], 4
      %s231 = int_to_ptr.vmem [resolvable:$true] %s230
      %s232 = sshll.u32 %s7, 4
      %s233 = int_to_ptr.hbm [resolvable:$true] %s232
      %235 = dma.vmem_to_hbm [thread:$0]  %s231, 128, %s233, [#allocation4]
    $region37: #{tpu_custom_call.1} parent=1 // pred_fallthru
      _
    // Predicated region
    $region38: #{tpu_custom_call.1} parent=1 // pred_check
      _
    $region39: #{tpu_custom_call.1} parent=1 // pred_check_branch
      %237 = sbr.rel (0) target = $region41
    $region40: #{tpu_custom_call.1} parent=1 // pred_region
      %239 = vsyncadd [#allocation7], 0
      %s241 = sshll.u32 [#allocation6], 4
      %s242 = int_to_ptr.vmem [resolvable:$true] %s241
      %s243 = sshll.u32 %s8, 4
      %s244 = int_to_ptr.hbm [resolvable:$true] %s243
      %246 = dma.vmem_to_hbm [thread:$0]  %s242, 384, %s244, [#allocation7]
    $region41: #{tpu_custom_call.1} parent=1 // pred_fallthru
      _
    // Predicated region
    $region42: #{tpu_custom_call.1} parent=1 // pred_check
      _
    $region43: #{tpu_custom_call.1} parent=1 // pred_check_branch
      %248 = sbr.rel (0) target = $region45
    $region44: #{tpu_custom_call.1} parent=1 // pred_region
      %250 = dma.done [#allocation4], 128
    $region45: #{tpu_custom_call.1} parent=1 // pred_fallthru
      _
    // Predicated region
    $region46: #{tpu_custom_call.1} parent=1 // pred_check
      _
    $region47: #{tpu_custom_call.1} parent=1 // pred_check_branch
      %252 = sbr.rel (0) target = $region49
    $region48: #{tpu_custom_call.1} parent=1 // pred_region
      %254 = dma.done [#allocation7], 384
    $region49: #{tpu_custom_call.1} parent=1 // pred_fallthru
      _
    %255 = vsyncpa [#allocation3], 1
    %256 = vsyncpa [#allocation4], 1
    %257 = vsyncpa [#allocation7], 1

</llo_original>
